<compile_context>
chip_gen: v6e
topology: v6e:2x2x1
jax: 0.10.0
libtpu: 0.0.40
codegen_flags: <defaults>
</compile_context>

<pallas_src>
import math

import jax
import jax.numpy as jnp
from jax.experimental import pallas as pl
from jax.experimental.pallas import tpu as pltpu


# ----------------------------------------------------------------------------
# Hardware queries (defensive — fall back to conservative defaults).
# ----------------------------------------------------------------------------
def _is_v5_device():
    try:
        return "v5" in jax.devices()[0].device_kind.lower()
    except Exception:
        return False


def _pick_vmem_limit_bytes():
    try:
        cap = int(pltpu.get_tpu_info().vmem_capacity_bytes)
    except Exception:
        cap = 64 * 1024 * 1024          # v7x per-core physical; safe lower bound
    # 128 MiB parts (v5e/v6e) -> 96 MiB scoped; 64 MiB parts (v7x) -> 48 MiB.
    return max(32 * 1024 * 1024, min((cap * 3) // 4, 100 * 1024 * 1024))


# ----------------------------------------------------------------------------
# Fused kernel: all CIN layers + linear head for one batch tile.
# Refs: x_ref, then per layer (w_ref, b_ref, head_ref), then o_ref.
# ----------------------------------------------------------------------------
def _make_cin_fused_kernel(layer_size, split_half, H0, mxu_dtype, build_z_low):
    L = len(layer_size)
    z_dtype = mxu_dtype if build_z_low else jnp.float32

    def kernel(*refs):
        x_ref = refs[0]
        o_ref = refs[-1]
        x0 = x_ref[...]                          # (H0, N) f32, lane-dense
        n = x0.shape[1]
        x0_z = x0.astype(z_dtype)                # hoisted once, reused every layer
        hidden_z = x0_z
        acc = jnp.zeros((1, n), jnp.float32)     # sum_f w_lin[f] * feature_map[f, :]
        for i in range(L):
            w_ref = refs[1 + 3 * i]              # (S, Hp*H0)  mxu_dtype (resident)
            b_ref = refs[2 + 3 * i]              # (S, 1)      f32 Conv1d bias
            h_ref = refs[3 + 3 * i]              # (S, 1)      f32 head col (0 on hidden half)
            Hp = hidden_z.shape[0]
            S = w_ref.shape[0]

            # z[h*H0 + m, :] = hidden[h, :] * x0[m, :]
            # (matches torch.einsum('bhd,bmd->bhmd').reshape(B, Hp*H0, D))
            # Single broadcasted outer product — pure VPU work, no concat loop.
            z = (hidden_z[:, None, :] * x0_z[None, :, :]).reshape(Hp * H0, n)

            # One MXU push per layer; bf16 operands, f32 accumulation.
            out = jnp.dot(w_ref[...], z.astype(mxu_dtype),
                          preferred_element_type=jnp.float32)
            out = jnp.maximum(out + b_ref[...], 0.0)          # bias + relu (f32)

            # Linear head folded in on VPU + one sublane (XLU) reduce.
            # Non-direct rows of h_ref are zero, so no sublane slice of `out`.
            acc = acc + jnp.sum(h_ref[...] * out, axis=0, keepdims=True)

            if i != L - 1:
                nh = S // 2 if split_half else S
                hidden_z = out[:nh, :].astype(z_dtype)         # prefix slice only

        o_ref[...] = acc.astype(o_ref.dtype)

    return kernel


# ----------------------------------------------------------------------------
# Batch-tile selection: true peak working set (not sum over layers), lane-aligned,
# and split into >=2 tiles when possible so both TensorCores get work.
# ----------------------------------------------------------------------------
def _choose_batch_tile(B, H0, D, layer_size, split_half, budget_bytes, z_elem_bytes):
    L = len(layer_size)
    f32b = 4
    hp = H0
    peak = 0
    for i, s in enumerate(layer_size):
        live = (hp * f32b                    # hidden (f32, previous relu output)
                + hp * z_elem_bytes          # hidden in z dtype
                + hp * H0 * z_elem_bytes     # z (biggest consumer)
                + s * f32b)                  # layer output (f32)
        peak = max(peak, live)
        hp = s // 2 if (split_half and i != L - 1) else s
    fixed = (2 * H0 * f32b                   # double-buffered x input tile
             + H0 * z_elem_bytes             # x0 in z dtype (hoisted)
             + 4 * f32b)                     # acc + double-buffered output row
    per_elem = int((peak + fixed) * D * 1.5)  # 1.5x headroom for relayout temps
    tb = max(1, budget_bytes // per_elem)

    lane_align = 128 // math.gcd(D, 128)     # ensures TB*D % 128 == 0 when tiling
    if tb >= B:
        # Whole batch fits one tile: still split into 2 lane-aligned tiles so a
        # megacore part (v7x) shards the "parallel" grid axis across both cores.
        if B >= 2 * lane_align:
            half = -(-B // 2)
            tb = -(-half // lane_align) * lane_align
            return int(min(tb, B))
        return B
    tb = max(lane_align, (tb // lane_align) * lane_align)
    return int(min(tb, B))


# ----------------------------------------------------------------------------
# Full CIN forward (single pallas_call; layout plumbing + tiny D-sum in XLA)
# ----------------------------------------------------------------------------
def cin_forward_pallas(x, ws, bs, w_lin, layer_size, split_half=True,
                       batch_tile=None, mxu_dtype=jnp.bfloat16):
    B, H0, D = x.shape
    L = len(layer_size)
    f32 = jnp.float32

    use_bf16 = (jnp.dtype(mxu_dtype) == jnp.dtype(jnp.bfloat16))
    # v5e VALU has no bf16: build z in f32 there, cast only the matmul operand.
    build_z_low = use_bf16 and not _is_v5_device()
    z_elem_bytes = 2 if build_z_low else 4

    vmem_limit = _pick_vmem_limit_bytes()
    if batch_tile is None:
        TB = _choose_batch_tile(B, H0, D, layer_size, split_half,
                                budget_bytes=int(vmem_limit * 0.6),
                                z_elem_bytes=z_elem_bytes)
    else:
        TB = max(1, min(int(batch_tile), B))
        lane_align = 128 // math.gcd(D, 128)
        if TB < B and TB % lane_align:       # validate caller-supplied tile
            TB = min(B, -(-TB // lane_align) * lane_align)

    num_tiles = pl.cdiv(B, TB)
    Bp = num_tiles * TB
    if Bp != B:
        x = jnp.pad(x, ((0, Bp - B), (0, 0), (0, 0)))

    # Lane-dense layout: columns are (batch, embedding) flattened -> b*D + d.
    x_t = jnp.transpose(x, (1, 0, 2)).reshape(H0, Bp * D).astype(f32)

    # Per-layer head columns: the (1, featuremap_num) linear weight is split by
    # layer and zero-padded on the "next_hidden" half -> no in-kernel slicing.
    wl = jnp.asarray(w_lin, f32).reshape(-1)

    args = [x_t]
    in_specs = [pl.BlockSpec((H0, TB * D), lambda t: (0, t))]
    off = 0
    for i, size in enumerate(layer_size):
        w = jnp.asarray(ws[i], f32).astype(mxu_dtype)        # (S, Hp*H0) Conv1d weight
        b = jnp.asarray(bs[i], f32).reshape(size, 1)         # (S, 1)     Conv1d bias
        if split_half and i != L - 1:
            ds_ = size // 2
            head_col = jnp.concatenate(
                [jnp.zeros((size - ds_,), f32), wl[off:off + ds_]]).reshape(size, 1)
        else:
            ds_ = size
            head_col = wl[off:off + ds_].reshape(size, 1)
        off += ds_
        args += [w, b, head_col]
        in_specs += [
            pl.BlockSpec(w.shape, lambda t: (0, 0)),
            pl.BlockSpec(b.shape, lambda t: (0, 0)),
            pl.BlockSpec(head_col.shape, lambda t: (0, 0)),
        ]

    out_dtype = jnp.bfloat16 if use_bf16 else jnp.float32
    kernel = _make_cin_fused_kernel(layer_size, split_half, H0, mxu_dtype, build_z_low)
    pre = pl.pallas_call(
        kernel,
        out_shape=jax.ShapeDtypeStruct((1, Bp * D), out_dtype),
        grid=(num_tiles,),
        in_specs=in_specs,
        out_specs=pl.BlockSpec((1, TB * D), lambda t: (0, t)),
        compiler_params=pltpu.CompilerParams(
            dimension_semantics=("parallel",),
            vmem_limit_bytes=vmem_limit),
    )(*args)

    # Tiny epilogue: per-element sum over the embedding dim D (the linear head was
    # already applied in-kernel); kept in XLA to avoid a lane->sublane relayout.
    result = pre.astype(f32).reshape(Bp, D).sum(axis=-1, keepdims=True)
    return result[:B]


# ----------------------------------------------------------------------------
# Parameter init (matches shapes from CIN.__init__ with split_half)
# ----------------------------------------------------------------------------
def init_cin_params(key, field_size, layer_size, split_half=True):
    field_nums = [field_size]
    ws, bs = [], []
    for i, size in enumerate(layer_size):
        c = field_nums[-1] * field_nums[0]
        key, kw, kb = jax.random.split(key, 3)
        ws.append(jax.random.normal(kw, (size, c), jnp.float32) * 0.1)  # Conv1d (S, C, 1) squeezed
        bs.append(jax.random.normal(kb, (size,), jnp.float32) * 0.1)    # Conv1d bias (S,)
        field_nums.append(size // 2 if (split_half and i != len(layer_size) - 1) else size)
    if split_half:
        featuremap_num = sum(layer_size[:-1]) // 2 + layer_size[-1]
    else:
        featuremap_num = sum(layer_size)
    key, kl = jax.random.split(key)
    w_lin = jax.random.normal(kl, (1, featuremap_num), jnp.float32) * 0.1  # nn.Linear(F,1,bias=False)
    return ws, bs, w_lin


# Pure-JAX reference (mirrors the PyTorch forward exactly).
def cin_forward_reference(x, ws, bs, w_lin, layer_size, split_half=True):
    B, H0, D = x.shape
    hidden = x
    finals = []
    for i, size in enumerate(layer_size):
        Hp = hidden.shape[1]
        z = jnp.einsum('bhd,bmd->bhmd', hidden, x).reshape(B, Hp * H0, D)
        out = jnp.einsum('sc,bcd->bsd', ws[i], z) + bs[i][None, :, None]
        out = jnp.maximum(out, 0.0)
        if split_half and i != len(layer_size) - 1:
            hidden = out[:, : size // 2, :]
            direct = out[:, size // 2:, :]
        else:
            direct = out
            hidden = out
        finals.append(direct)
    feat = jnp.concatenate(finals, axis=1)
    pooled = jnp.sum(feat, axis=-1)
    return pooled @ w_lin.T


if __name__ == "__main__":
    # Small shapes consistent with the module: (batch, field_size, embedding_size)
    FIELD, D = 8, 16
    layer_size = (16, 16)       # split_half=True -> featuremap_num = 16//2 + 16 = 24

    key = jax.random.PRNGKey(0)
    kx, kp, kx2, kx3 = jax.random.split(key, 4)
    ws, bs, w_lin = init_cin_params(kp, FIELD, layer_size, split_half=True)

    # Test 1: exact-parity f32 MXU path, tiny batch, single full-extent tile.
    B = 2
    x = jax.random.normal(kx, (B, FIELD, D), jnp.float32)
    out = cin_forward_pallas(x, ws, bs, w_lin, layer_size, split_half=True,
                             mxu_dtype=jnp.float32)
    out = jax.block_until_ready(out)
    ref = cin_forward_reference(x, ws, bs, w_lin, layer_size, split_half=True)
    assert out.shape == (B, 1), out.shape
    assert jnp.allclose(out, ref, atol=1e-4, rtol=1e-4), (out, ref)

    # Test 2: default bf16 MXU path, explicit batch_tile -> multi-tile grid + padding.
    B2 = 24
    x2 = jax.random.normal(kx2, (B2, FIELD, D), jnp.float32)
    out2 = cin_forward_pallas(x2, ws, bs, w_lin, layer_size, split_half=True,
                              batch_tile=16)
    out2 = jax.block_until_ready(out2)
    ref2 = cin_forward_reference(x2, ws, bs, w_lin, layer_size, split_half=True)
    assert out2.shape == (B2, 1), out2.shape
    assert jnp.allclose(out2, ref2, atol=1e-1, rtol=1e-1), (out2, ref2)  # bf16 MXU tol

    # Test 3: default bf16 path, auto tile size -> exercises the "split into >=2
    # tiles for megacore" path (B=32 -> two 16-element tiles, no padding).
    B3 = 32
    x3 = jax.random.normal(kx3, (B3, FIELD, D), jnp.float32)
    out3 = cin_forward_pallas(x3, ws, bs, w_lin, layer_size, split_half=True)
    out3 = jax.block_until_ready(out3)
    ref3 = cin_forward_reference(x3, ws, bs, w_lin, layer_size, split_half=True)
    assert out3.shape == (B3, 1), out3.shape
    assert jnp.allclose(out3, ref3, atol=1e-1, rtol=1e-1), (out3, ref3)  # bf16 MXU tol

    print("KERNEL_OK")
</pallas_src>

<mosaic_0001>
module attributes {stable_mosaic.version = 11 : i64} {
  func.func @kernel(%arg0: i32, %arg1: memref<8x32xf32, #tpu.memory_space<vmem>>, %arg2: memref<16x64xf32, #tpu.memory_space<vmem>>, %arg3: memref<16x1xf32, #tpu.memory_space<vmem>>, %arg4: memref<16x1xf32, #tpu.memory_space<vmem>>, %arg5: memref<16x64xf32, #tpu.memory_space<vmem>>, %arg6: memref<16x1xf32, #tpu.memory_space<vmem>>, %arg7: memref<16x1xf32, #tpu.memory_space<vmem>>, %arg8: memref<1x32xf32, #tpu.memory_space<vmem>>) attributes {dimension_semantics = [#tpu.dimension_semantics<parallel>], iteration_bounds = array<i64: 1>, scalar_prefetch = 0 : i64, scratch_operands = 0 : i64, tpu.core_type = #tpu.core_type<tc>, window_params = [{transform_indices = @transform_0, window_bounds = array<i64: 8, 32>}, {pipeline_mode = #tpu.pipeline_mode<synchronous>, transform_indices = @transform_1, window_bounds = array<i64: 16, 64>}, {pipeline_mode = #tpu.pipeline_mode<synchronous>, transform_indices = @transform_2, window_bounds = array<i64: 16, 1>}, {pipeline_mode = #tpu.pipeline_mode<synchronous>, transform_indices = @transform_3, window_bounds = array<i64: 16, 1>}, {pipeline_mode = #tpu.pipeline_mode<synchronous>, transform_indices = @transform_4, window_bounds = array<i64: 16, 64>}, {pipeline_mode = #tpu.pipeline_mode<synchronous>, transform_indices = @transform_5, window_bounds = array<i64: 16, 1>}, {pipeline_mode = #tpu.pipeline_mode<synchronous>, transform_indices = @transform_6, window_bounds = array<i64: 16, 1>}, {transform_indices = @transform_7, window_bounds = array<i64: 1, 32>}]} {
    %c0 = arith.constant 0 : index
    %c0_0 = arith.constant 0 : index
    %0 = vector.load %arg1[%c0, %c0_0] : memref<8x32xf32, #tpu.memory_space<vmem>>, vector<8x32xf32>
    %cst = arith.constant 0.000000e+00 : f32
    %1 = vector.broadcast %cst : f32 to vector<1x32xf32>
    %2 = vector.shape_cast %0 : vector<8x32xf32> to vector<8x1x32xf32>
    %3 = vector.shape_cast %0 : vector<8x32xf32> to vector<1x8x32xf32>
    %4 = vector.broadcast %2 : vector<8x1x32xf32> to vector<8x8x32xf32>
    %5 = vector.broadcast %3 : vector<1x8x32xf32> to vector<8x8x32xf32>
    %6 = arith.mulf %4, %5 : vector<8x8x32xf32>
    %7 = vector.shape_cast %6 : vector<8x8x32xf32> to vector<64x32xf32>
    %c0_1 = arith.constant 0 : index
    %c0_2 = arith.constant 0 : index
    %8 = vector.load %arg2[%c0_1, %c0_2] : memref<16x64xf32, #tpu.memory_space<vmem>>, vector<16x64xf32>
    %cst_3 = arith.constant dense<0.000000e+00> : vector<16x32xf32>
    %9 = tpu.matmul %8, %7, %cst_3 {dimension_numbers = #tpu.dot_dimension_numbers<[1], [0], [0], [1], [0, 0, 1, 1], [], []>} : vector<16x64xf32>, vector<64x32xf32>, vector<16x32xf32> -> vector<16x32xf32>
    %c0_4 = arith.constant 0 : index
    %c0_5 = arith.constant 0 : index
    %10 = vector.load %arg3[%c0_4, %c0_5] : memref<16x1xf32, #tpu.memory_space<vmem>>, vector<16x1xf32>
    %11 = vector.broadcast %10 : vector<16x1xf32> to vector<16x32xf32>
    %12 = arith.addf %9, %11 : vector<16x32xf32>
    %cst_6 = arith.constant 0.000000e+00 : f32
    %13 = vector.broadcast %cst_6 : f32 to vector<16x32xf32>
    %14 = arith.maximumf %12, %13 : vector<16x32xf32>
    %c0_7 = arith.constant 0 : index
    %c0_8 = arith.constant 0 : index
    %15 = vector.load %arg4[%c0_7, %c0_8] : memref<16x1xf32, #tpu.memory_space<vmem>>, vector<16x1xf32>
    %16 = vector.broadcast %15 : vector<16x1xf32> to vector<16x32xf32>
    %17 = arith.mulf %16, %14 : vector<16x32xf32>
    %cst_9 = arith.constant dense<0.000000e+00> : vector<32xf32>
    %18 = vector.multi_reduction <add>, %17, %cst_9 [0] : vector<16x32xf32> to vector<32xf32>
    %19 = vector.shape_cast %18 : vector<32xf32> to vector<1x32xf32>
    %20 = arith.addf %1, %19 : vector<1x32xf32>
    %21 = vector.extract_strided_slice %14 {offsets = [0, 0], sizes = [8, 32], strides = [1, 1]} : vector<16x32xf32> to vector<8x32xf32>
    %22 = vector.shape_cast %21 : vector<8x32xf32> to vector<8x1x32xf32>
    %23 = vector.shape_cast %0 : vector<8x32xf32> to vector<1x8x32xf32>
    %24 = vector.broadcast %22 : vector<8x1x32xf32> to vector<8x8x32xf32>
    %25 = vector.broadcast %23 : vector<1x8x32xf32> to vector<8x8x32xf32>
    %26 = arith.mulf %24, %25 : vector<8x8x32xf32>
    %27 = vector.shape_cast %26 : vector<8x8x32xf32> to vector<64x32xf32>
    %c0_10 = arith.constant 0 : index
    %c0_11 = arith.constant 0 : index
    %28 = vector.load %arg5[%c0_10, %c0_11] : memref<16x64xf32, #tpu.memory_space<vmem>>, vector<16x64xf32>
    %cst_12 = arith.constant dense<0.000000e+00> : vector<16x32xf32>
    %29 = tpu.matmul %28, %27, %cst_12 {dimension_numbers = #tpu.dot_dimension_numbers<[1], [0], [0], [1], [0, 0, 1, 1], [], []>} : vector<16x64xf32>, vector<64x32xf32>, vector<16x32xf32> -> vector<16x32xf32>
    %c0_13 = arith.constant 0 : index
    %c0_14 = arith.constant 0 : index
    %30 = vector.load %arg6[%c0_13, %c0_14] : memref<16x1xf32, #tpu.memory_space<vmem>>, vector<16x1xf32>
    %31 = vector.broadcast %30 : vector<16x1xf32> to vector<16x32xf32>
    %32 = arith.addf %29, %31 : vector<16x32xf32>
    %cst_15 = arith.constant 0.000000e+00 : f32
    %33 = vector.broadcast %cst_15 : f32 to vector<16x32xf32>
    %34 = arith.maximumf %32, %33 : vector<16x32xf32>
    %c0_16 = arith.constant 0 : index
    %c0_17 = arith.constant 0 : index
    %35 = vector.load %arg7[%c0_16, %c0_17] : memref<16x1xf32, #tpu.memory_space<vmem>>, vector<16x1xf32>
    %36 = vector.broadcast %35 : vector<16x1xf32> to vector<16x32xf32>
    %37 = arith.mulf %36, %34 : vector<16x32xf32>
    %cst_18 = arith.constant dense<0.000000e+00> : vector<32xf32>
    %38 = vector.multi_reduction <add>, %37, %cst_18 [0] : vector<16x32xf32> to vector<32xf32>
    %39 = vector.shape_cast %38 : vector<32xf32> to vector<1x32xf32>
    %40 = arith.addf %20, %39 : vector<1x32xf32>
    %c0_19 = arith.constant 0 : index
    %c0_20 = arith.constant 0 : index
    %41 = vector.load %arg8[%c0_19, %c0_20] : memref<1x32xf32, #tpu.memory_space<vmem>>, vector<1x32xf32>
    tpu.vector_store %arg8[%c0_19, %c0_20], %40 {strides = array<i32>} : memref<1x32xf32, #tpu.memory_space<vmem>>, vector<1x32xf32>,
    return
  }
  func.func @transform_0(%arg0: i32) -> (i32, i32) {
    %c0_i32 = arith.constant 0 : i32
    %c0_i32_0 = arith.constant 0 : i32
    return %c0_i32, %arg0 : i32, i32
  }
  func.func @transform_1(%arg0: i32) -> (i32, i32) {
    %c0_i32 = arith.constant 0 : i32
    %c0_i32_0 = arith.constant 0 : i32
    %c0_i32_1 = arith.constant 0 : i32
    return %c0_i32, %c0_i32_0 : i32, i32
  }
  func.func @transform_2(%arg0: i32) -> (i32, i32) {
    %c0_i32 = arith.constant 0 : i32
    %c0_i32_0 = arith.constant 0 : i32
    %c0_i32_1 = arith.constant 0 : i32
    return %c0_i32, %c0_i32_0 : i32, i32
  }
  func.func @transform_3(%arg0: i32) -> (i32, i32) {
    %c0_i32 = arith.constant 0 : i32
    %c0_i32_0 = arith.constant 0 : i32
    %c0_i32_1 = arith.constant 0 : i32
    return %c0_i32, %c0_i32_0 : i32, i32
  }
  func.func @transform_4(%arg0: i32) -> (i32, i32) {
    %c0_i32 = arith.constant 0 : i32
    %c0_i32_0 = arith.constant 0 : i32
    %c0_i32_1 = arith.constant 0 : i32
    return %c0_i32, %c0_i32_0 : i32, i32
  }
  func.func @transform_5(%arg0: i32) -> (i32, i32) {
    %c0_i32 = arith.constant 0 : i32
    %c0_i32_0 = arith.constant 0 : i32
    %c0_i32_1 = arith.constant 0 : i32
    return %c0_i32, %c0_i32_0 : i32, i32
  }
  func.func @transform_6(%arg0: i32) -> (i32, i32) {
    %c0_i32 = arith.constant 0 : i32
    %c0_i32_0 = arith.constant 0 : i32
    %c0_i32_1 = arith.constant 0 : i32
    return %c0_i32, %c0_i32_0 : i32, i32
  }
  func.func @transform_7(%arg0: i32) -> (i32, i32) {
    %c0_i32 = arith.constant 0 : i32
    %c0_i32_0 = arith.constant 0 : i32
    return %c0_i32, %arg0 : i32, i32
  }
}

</mosaic_0001>

<llo_original>
// kernel: tpu_custom_call.1
$region0: #{tpu_custom_call.1}
  #allocation0 [shape = 'u32[]', space=smem, size = 0x4, offset = 0x4, fixed_abs, tag = 'smem constant byte address 0x4 - core index']
  #allocation1 [shape = 'u32[144,128]{1,0:T(1,128)}', space=vmem, size = 0x12000, scoped, tag = 'internal scratch']
  %s0 = inlined_call_operand.vmem [shape: f32[8,32], index: 0, kind: input, shape index: {}]
  %s1 = inlined_call_operand.vmem [shape: f32[16,64], index: 1, kind: input, shape index: {}]
  %s2 = inlined_call_operand.vmem [shape: f32[16,1], index: 2, kind: input, shape index: {}]
  %s3 = inlined_call_operand.vmem [shape: f32[16,1], index: 3, kind: input, shape index: {}]
  %s4 = inlined_call_operand.vmem [shape: f32[16,64], index: 4, kind: input, shape index: {}]
  %s5 = inlined_call_operand.vmem [shape: f32[16,1], index: 5, kind: input, shape index: {}]
  %s6 = inlined_call_operand.vmem [shape: f32[16,1], index: 6, kind: input, shape index: {}]
  %s7 = inlined_call_operand.hbm [shape: f32[1,32], index: 7, kind: output, shape index: {}]
  %s8 = sld [smem:[#allocation0]]
  $region38: #{tpu_custom_call.1} parent=0
    _
  %s10 = ssub.s32 1, %s8
  %s11 = scalar_select 0, %s10, %s8
  $region1: #{tpu_custom_call.1} parent=0
    #allocation2 [shape = 'u8[512]{0}', space=vmem, size = 0x400, scoped, tag = 'output window, operand 0, single buffered']
    #allocation3 [shape = 's32[1]{0}', space=sflag, size = 0x4, scoped, tag = 'scoped memory for tpu_custom_call.1']
    %12 = vsyncpa [#allocation3], 0
    // Predicated region
    $region2: #{tpu_custom_call.1} parent=1 // pred_check
      _
    $region3: #{tpu_custom_call.1} parent=1 // pred_check_branch
      %14 = sbr.rel (0) target = $region5
    $region4: #{tpu_custom_call.1} parent=1 // pred_region
      _
    $region5: #{tpu_custom_call.1} parent=1 // pred_fallthru
      _
    // Predicated region
    $region6: #{tpu_custom_call.1} parent=1 // pred_check
      _
    $region7: #{tpu_custom_call.1} parent=1 // pred_check_branch
      %16 = sbr.rel (0) target = $region9
    $region8: #{tpu_custom_call.1} parent=1 // pred_region
      _
    $region9: #{tpu_custom_call.1} parent=1 // pred_fallthru
      _
    // Predicated region
    $region10: #{tpu_custom_call.1} parent=1 // pred_check
      _
    $region11: #{tpu_custom_call.1} parent=1 // pred_check_branch
      %18 = sbr.rel (0) target = $region13
    $region12: #{tpu_custom_call.1} parent=1 // pred_region
      _
    $region13: #{tpu_custom_call.1} parent=1 // pred_fallthru
      _
    // Predicated region
    $region14: #{tpu_custom_call.1} parent=1 // pred_check
      _
    $region15: #{tpu_custom_call.1} parent=1 // pred_check_branch
      %20 = sbr.rel (0) target = $region17
    $region16: #{tpu_custom_call.1} parent=1 // pred_region
      _
    $region17: #{tpu_custom_call.1} parent=1 // pred_fallthru
      _
    // Predicated region
    $region18: #{tpu_custom_call.1} parent=1 // pred_check
      _
    $region19: #{tpu_custom_call.1} parent=1 // pred_check_branch
      %22 = sbr.rel (0) target = $region21
    $region20: #{tpu_custom_call.1} parent=1 // pred_region
      _
    $region21: #{tpu_custom_call.1} parent=1 // pred_fallthru
      _
    // Predicated region
    $region22: #{tpu_custom_call.1} parent=1 // pred_check
      _
    $region23: #{tpu_custom_call.1} parent=1 // pred_check_branch
      %24 = sbr.rel (0) target = $region25
    $region24: #{tpu_custom_call.1} parent=1 // pred_region
      _
    $region25: #{tpu_custom_call.1} parent=1 // pred_fallthru
      _
    // Predicated region
    $region26: #{tpu_custom_call.1} parent=1 // pred_check
      _
    $region27: #{tpu_custom_call.1} parent=1 // pred_check_branch
      %26 = sbr.rel (0) target = $region29
    $region28: #{tpu_custom_call.1} parent=1 // pred_region
      _
    $region29: #{tpu_custom_call.1} parent=1 // pred_fallthru
      _
    %v27 = vld [vmem:[%s0] sm:$0xff]
    %v29 = vcombine.high %v27, %v27
    %v31 = vunpack.c.l.s4 1966171168
    %v32 = vunpack.c.0.s8 %v31
    %v33 = vlaneseq
    %v34 = vshrl.u32 %v33, 7
    %v35 = vsub.s32 %v32, %v34
    %v36 = vrot.slane %v27, %v35
    %v38 = vunpack.c.l.s4 1966171168
    %v39 = vunpack.c.0.s8 %v38
    %v40 = vlaneseq
    %v41 = vshrl.u32 %v40, 7
    %v42 = vsub.s32 %v39, %v41
    %v43 = vrot.slane %v29, %v42
    %v44 = vcombine.high %v36, %v36
    %v45 = vcombine.high %v43, %v43
    %v47 = vunpack.c.l.s4 1966171168
    %v48 = vunpack.c.0.s8 %v47
    %v49 = vlaneseq
    %v50 = vshrl.u32 %v49, 7
    %v51 = vsub.s32 %v48, %v50
    %v52 = vrot.slane %v36, %v51
    %v54 = vunpack.c.l.s4 1966171168
    %v55 = vunpack.c.0.s8 %v54
    %v56 = vlaneseq
    %v57 = vshrl.u32 %v56, 7
    %v58 = vsub.s32 %v55, %v57
    %v59 = vrot.slane %v43, %v58
    %v61 = vunpack.c.l.s4 1966171168
    %v62 = vunpack.c.0.s8 %v61
    %v63 = vlaneseq
    %v64 = vshrl.u32 %v63, 7
    %v65 = vsub.s32 %v62, %v64
    %v66 = vrot.slane %v44, %v65
    %v68 = vunpack.c.l.s4 1966171168
    %v69 = vunpack.c.0.s8 %v68
    %v70 = vlaneseq
    %v71 = vshrl.u32 %v70, 7
    %v72 = vsub.s32 %v69, %v71
    %v73 = vrot.slane %v45, %v72
    %v74 = vcombine.high %v52, %v52
    %v75 = vcombine.high %v59, %v59
    %v76 = vcombine.high %v66, %v66
    %v77 = vcombine.high %v73, %v73
    %v78 = vlaneseq
    %v79 = vshrl.u32 %v78, 7
    %v80 = vsub.s32 0, %v79
    %v81 = vrot.slane %v52, %v80
    %v82 = vlaneseq
    %v83 = vshrl.u32 %v82, 7
    %v84 = vsub.s32 0, %v83
    %v85 = vrot.slane %v66, %v84
    %v86 = vlaneseq
    %v87 = vshrl.u32 %v86, 7
    %v88 = vsub.s32 0, %v87
    %v89 = vrot.slane %v74, %v88
    %v90 = vlaneseq
    %v91 = vshrl.u32 %v90, 7
    %v92 = vsub.s32 0, %v91
    %v93 = vrot.slane %v76, %v92
    %v94 = vlaneseq
    %v95 = vshrl.u32 %v94, 7
    %v96 = vsub.s32 0, %v95
    %v97 = vrot.slane %v59, %v96
    %v98 = vlaneseq
    %v99 = vshrl.u32 %v98, 7
    %v100 = vsub.s32 0, %v99
    %v101 = vrot.slane %v73, %v100
    %v102 = vlaneseq
    %v103 = vshrl.u32 %v102, 7
    %v104 = vsub.s32 0, %v103
    %v105 = vrot.slane %v75, %v104
    %v106 = vlaneseq
    %v107 = vshrl.u32 %v106, 7
    %v108 = vsub.s32 0, %v107
    %v109 = vrot.slane %v77, %v108
    %v118 = vmul.f32 %v81, %v27
    %v119 = vmul.f32 %v85, %v27
    %v120 = vmul.f32 %v89, %v27
    %v121 = vmul.f32 %v93, %v27
    %v122 = vmul.f32 %v97, %v27
    %v123 = vmul.f32 %v101, %v27
    %v124 = vmul.f32 %v105, %v27
    %v125 = vmul.f32 %v109, %v27
    %v126 = vld [vmem:[%s1] sm:$0xff]
    %v127 = vld [vmem:[%s1 + $0x8] sm:$0xff]
    %v128 = vld [vmem:[%s2] sm:$0xff]
    %v129 = vld [vmem:[%s2 + $0x8] sm:$0xff]
    %131 = vset.pattern.permute.xlu0 0
    %132 = vperm.xlu0 %131, %v128
    %v133 = vpop.permute.xlu0 %132
    %136 = vset.pattern.permute.xlu0 0
    %137 = vperm.xlu0 %136, %v129
    %v138 = vpop.permute.xlu0 %137
    %vm140 = vcmask 523264
    %v142 = vsel %vm140, %v126, 0
    %v145 = vsel %vm140, %v127, 0
    %147 = vmatprep.subr.mxu0 0.0
    %148 = vmatpush1.msra.mxu0 0.0
    %149 = vmatprep.subr.mxu0 0.0
    %150 = vmatpush1.msra.mxu0 0.0
    %151 = vmatprep.subr.mxu0 0.0
    %152 = vmatpush1.msra.mxu0 0.0
    %153 = vmatprep.subr.mxu0 0.0
    %154 = vmatpush1.msra.mxu0 0.0
    %155 = vmatprep.subr.mxu0 0.0
    %156 = vmatpush1.msra.mxu0 0.0
    %157 = vmatprep.subr.mxu0 0.0
    %158 = vmatpush1.msra.mxu0 0.0
    %159 = vmatprep.subr.mxu0 0.0
    %160 = vmatpush1.msra.mxu0 0.0
    %161 = vmatprep.subr.mxu0 0.0
    %162 = vmatpush1.msra.mxu0 0.0
    %163 = vmatprep.subr.mxu0 0.0
    %164 = vmatpush1.msra.mxu0 %v125
    %165 = vmatprep.subr.mxu0 0.0
    %166 = vmatpush1.msra.mxu0 %v124
    %167 = vmatprep.subr.mxu0 0.0
    %168 = vmatpush1.msra.mxu0 %v123
    %169 = vmatprep.subr.mxu0 0.0
    %170 = vmatpush1.msra.mxu0 %v122
    %171 = vmatprep.subr.mxu0 0.0
    %172 = vmatpush1.msra.mxu0 %v121
    %173 = vmatprep.subr.mxu0 0.0
    %174 = vmatpush1.msra.mxu0 %v120
    %175 = vmatprep.subr.mxu0 0.0
    %176 = vmatpush1.msra.mxu0 %v119
    %177 = vmatprep.subr.mxu0 0.0
    %178 = vmatpush1.msra.mxu0 %v118
    %179 = vmatprep.subr.mxu0 0.0
    %180 = vmatpush2.msra.mxu0 0.0
    %181 = vmatprep.subr.mxu0 0.0
    %182 = vmatpush2.msra.mxu0 0.0
    %183 = vmatprep.subr.mxu0 0.0
    %184 = vmatpush2.msra.mxu0 0.0
    %185 = vmatprep.subr.mxu0 0.0
    %186 = vmatpush2.msra.mxu0 0.0
    %187 = vmatprep.subr.mxu0 0.0
    %188 = vmatpush2.msra.mxu0 0.0
    %189 = vmatprep.subr.mxu0 0.0
    %190 = vmatpush2.msra.mxu0 0.0
    %191 = vmatprep.subr.mxu0 0.0
    %192 = vmatpush2.msra.mxu0 0.0
    %193 = vmatprep.subr.mxu0 0.0
    %194 = vmatpush2.msra.mxu0 0.0
    %195 = vmatprep.subr.mxu0 0.0
    %196 = vmatpush2.msra.mxu0 0.0
    %197 = vmatprep.subr.mxu0 0.0
    %198 = vmatpush2.msra.mxu0 0.0
    %199 = vmatprep.subr.mxu0 0.0
    %200 = vmatpush2.msra.mxu0 0.0
    %201 = vmatprep.subr.mxu0 0.0
    %202 = vmatpush2.msra.mxu0 0.0
    %203 = vmatprep.subr.mxu0 0.0
    %204 = vmatpush2.msra.mxu0 0.0
    %205 = vmatprep.subr.mxu0 0.0
    %206 = vmatpush2.msra.mxu0 0.0
    %207 = vmatprep.subr.mxu0 0.0
    %208 = vmatpush2.msra.mxu0 0.0
    %209 = vmatprep.subr.mxu0 0.0
    %210 = vmatpush2.msra.mxu0 0.0
    %211 = vmatprep.mubr.f32.mxu0 0.0
    %212 = vmatmul.mubr.f32.gmra.mxu0 %v142
    %v213 = vpop.f32.mrf.mxu0
    %v214 = vadd.f32 %v133, %v213
    %v215 = vpop.f32.mrf.mxu0
    %216 = vmatprep.mubr.f32.mxu0 0.0
    %217 = vmatmul.mubr.f32.gmra.mxu0 %v145
    %v218 = vpop.f32.mrf.mxu0
    %v219 = vadd.f32 %v138, %v218
    %v220 = vpop.f32.mrf.mxu0
    %221 = vdwg.mxu0
    %v222 = vmax.f32 %v214, 0.0
    %v223 = vmax.f32 %v219, 0.0
    %v224 = vld [vmem:[%s3] sm:$0xff]
    %v225 = vld [vmem:[%s3 + $0x8] sm:$0xff]
    %227 = vset.pattern.permute.xlu0 0
    %228 = vperm.xlu0 %227, %v224
    %v229 = vpop.permute.xlu0 %228
    %232 = vset.pattern.permute.xlu0 0
    %233 = vperm.xlu0 %232, %v225
    %v234 = vpop.permute.xlu0 %233
    %v236 = vmul.f32 %v229, %v222
    %v237 = vmul.f32 %v234, %v223
    %vm238 = vcmask 261120
    %v239 = vsel %vm238, %v236, 0.0
    %v240 = vsel %vm238, %v237, 0.0
    %v241 = vadd.f32 %v239, %v240
    %v242 = vrot.slane %v241, 4
    %v243 = vadd.f32 %v241, %v242
    %v244 = vrot.slane %v243, 2
    %v245 = vadd.f32 %v243, %v244
    %v246 = vrot.slane %v245, 1
    %v247 = vadd.f32 %v245, %v246
    %v248 = vadd.f32 %v247, 0.0
    %v250 = vcombine.high %v222, %v222
    %v252 = vunpack.c.l.s4 1966171168
    %v253 = vunpack.c.0.s8 %v252
    %v254 = vlaneseq
    %v255 = vshrl.u32 %v254, 7
    %v256 = vsub.s32 %v253, %v255
    %v257 = vrot.slane %v222, %v256
    %v259 = vunpack.c.l.s4 1966171168
    %v260 = vunpack.c.0.s8 %v259
    %v261 = vlaneseq
    %v262 = vshrl.u32 %v261, 7
    %v263 = vsub.s32 %v260, %v262
    %v264 = vrot.slane %v250, %v263
    %v265 = vcombine.high %v257, %v257
    %v266 = vcombine.high %v264, %v264
    %v268 = vunpack.c.l.s4 1966171168
    %v269 = vunpack.c.0.s8 %v268
    %v270 = vlaneseq
    %v271 = vshrl.u32 %v270, 7
    %v272 = vsub.s32 %v269, %v271
    %v273 = vrot.slane %v257, %v272
    %v275 = vunpack.c.l.s4 1966171168
    %v276 = vunpack.c.0.s8 %v275
    %v277 = vlaneseq
    %v278 = vshrl.u32 %v277, 7
    %v279 = vsub.s32 %v276, %v278
    %v280 = vrot.slane %v264, %v279
    %v282 = vunpack.c.l.s4 1966171168
    %v283 = vunpack.c.0.s8 %v282
    %v284 = vlaneseq
    %v285 = vshrl.u32 %v284, 7
    %v286 = vsub.s32 %v283, %v285
    %v287 = vrot.slane %v265, %v286
    %v289 = vunpack.c.l.s4 1966171168
    %v290 = vunpack.c.0.s8 %v289
    %v291 = vlaneseq
    %v292 = vshrl.u32 %v291, 7
    %v293 = vsub.s32 %v290, %v292
    %v294 = vrot.slane %v266, %v293
    %v295 = vcombine.high %v273, %v273
    %v296 = vcombine.high %v280, %v280
    %v297 = vcombine.high %v287, %v287
    %v298 = vcombine.high %v294, %v294
    %v299 = vlaneseq
    %v300 = vshrl.u32 %v299, 7
    %v301 = vsub.s32 0, %v300
    %v302 = vrot.slane %v273, %v301
    %v303 = vlaneseq
    %v304 = vshrl.u32 %v303, 7
    %v305 = vsub.s32 0, %v304
    %v306 = vrot.slane %v287, %v305
    %v307 = vlaneseq
    %v308 = vshrl.u32 %v307, 7
    %v309 = vsub.s32 0, %v308
    %v310 = vrot.slane %v295, %v309
    %v311 = vlaneseq
    %v312 = vshrl.u32 %v311, 7
    %v313 = vsub.s32 0, %v312
    %v314 = vrot.slane %v297, %v313
    %v315 = vlaneseq
    %v316 = vshrl.u32 %v315, 7
    %v317 = vsub.s32 0, %v316
    %v318 = vrot.slane %v280, %v317
    %v319 = vlaneseq
    %v320 = vshrl.u32 %v319, 7
    %v321 = vsub.s32 0, %v320
    %v322 = vrot.slane %v294, %v321
    %v323 = vlaneseq
    %v324 = vshrl.u32 %v323, 7
    %v325 = vsub.s32 0, %v324
    %v326 = vrot.slane %v296, %v325
    %v327 = vlaneseq
    %v328 = vshrl.u32 %v327, 7
    %v329 = vsub.s32 0, %v328
    %v330 = vrot.slane %v298, %v329
    %v339 = vmul.f32 %v302, %v27
    %v340 = vmul.f32 %v306, %v27
    %v341 = vmul.f32 %v310, %v27
    %v342 = vmul.f32 %v314, %v27
    %v343 = vmul.f32 %v318, %v27
    %v344 = vmul.f32 %v322, %v27
    %v345 = vmul.f32 %v326, %v27
    %v346 = vmul.f32 %v330, %v27
    %v347 = vld [vmem:[%s4] sm:$0xff]
    %v348 = vld [vmem:[%s4 + $0x8] sm:$0xff]
    %v349 = vld [vmem:[%s5] sm:$0xff]
    %v350 = vld [vmem:[%s5 + $0x8] sm:$0xff]
    %352 = vset.pattern.permute.xlu0 0
    %353 = vperm.xlu0 %352, %v349
    %v354 = vpop.permute.xlu0 %353
    %357 = vset.pattern.permute.xlu0 0
    %358 = vperm.xlu0 %357, %v350
    %v359 = vpop.permute.xlu0 %358
    %v362 = vsel %vm140, %v347, 0
    %v365 = vsel %vm140, %v348, 0
    %367 = vmatprep.subr.mxu0 0.0
    %368 = vmatpush1.msra.mxu0 0.0
    %369 = vmatprep.subr.mxu0 0.0
    %370 = vmatpush1.msra.mxu0 0.0
    %371 = vmatprep.subr.mxu0 0.0
    %372 = vmatpush1.msra.mxu0 0.0
    %373 = vmatprep.subr.mxu0 0.0
    %374 = vmatpush1.msra.mxu0 0.0
    %375 = vmatprep.subr.mxu0 0.0
    %376 = vmatpush1.msra.mxu0 0.0
    %377 = vmatprep.subr.mxu0 0.0
    %378 = vmatpush1.msra.mxu0 0.0
    %379 = vmatprep.subr.mxu0 0.0
    %380 = vmatpush1.msra.mxu0 0.0
    %381 = vmatprep.subr.mxu0 0.0
    %382 = vmatpush1.msra.mxu0 0.0
    %383 = vmatprep.subr.mxu0 0.0
    %384 = vmatpush1.msra.mxu0 %v346
    %385 = vmatprep.subr.mxu0 0.0
    %386 = vmatpush1.msra.mxu0 %v345
    %387 = vmatprep.subr.mxu0 0.0
    %388 = vmatpush1.msra.mxu0 %v344
    %389 = vmatprep.subr.mxu0 0.0
    %390 = vmatpush1.msra.mxu0 %v343
    %391 = vmatprep.subr.mxu0 0.0
    %392 = vmatpush1.msra.mxu0 %v342
    %393 = vmatprep.subr.mxu0 0.0
    %394 = vmatpush1.msra.mxu0 %v341
    %395 = vmatprep.subr.mxu0 0.0
    %396 = vmatpush1.msra.mxu0 %v340
    %397 = vmatprep.subr.mxu0 0.0
    %398 = vmatpush1.msra.mxu0 %v339
    %399 = vmatprep.subr.mxu0 0.0
    %400 = vmatpush2.msra.mxu0 0.0
    %401 = vmatprep.subr.mxu0 0.0
    %402 = vmatpush2.msra.mxu0 0.0
    %403 = vmatprep.subr.mxu0 0.0
    %404 = vmatpush2.msra.mxu0 0.0
    %405 = vmatprep.subr.mxu0 0.0
    %406 = vmatpush2.msra.mxu0 0.0
    %407 = vmatprep.subr.mxu0 0.0
    %408 = vmatpush2.msra.mxu0 0.0
    %409 = vmatprep.subr.mxu0 0.0
    %410 = vmatpush2.msra.mxu0 0.0
    %411 = vmatprep.subr.mxu0 0.0
    %412 = vmatpush2.msra.mxu0 0.0
    %413 = vmatprep.subr.mxu0 0.0
    %414 = vmatpush2.msra.mxu0 0.0
    %415 = vmatprep.subr.mxu0 0.0
    %416 = vmatpush2.msra.mxu0 0.0
    %417 = vmatprep.subr.mxu0 0.0
    %418 = vmatpush2.msra.mxu0 0.0
    %419 = vmatprep.subr.mxu0 0.0
    %420 = vmatpush2.msra.mxu0 0.0
    %421 = vmatprep.subr.mxu0 0.0
    %422 = vmatpush2.msra.mxu0 0.0
    %423 = vmatprep.subr.mxu0 0.0
    %424 = vmatpush2.msra.mxu0 0.0
    %425 = vmatprep.subr.mxu0 0.0
    %426 = vmatpush2.msra.mxu0 0.0
    %427 = vmatprep.subr.mxu0 0.0
    %428 = vmatpush2.msra.mxu0 0.0
    %429 = vmatprep.subr.mxu0 0.0
    %430 = vmatpush2.msra.mxu0 0.0
    %431 = vmatprep.mubr.f32.mxu0 0.0
    %432 = vmatmul.mubr.f32.gmra.mxu0 %v362
    %v433 = vpop.f32.mrf.mxu0
    %v434 = vadd.f32 %v354, %v433
    %v435 = vpop.f32.mrf.mxu0
    %436 = vmatprep.mubr.f32.mxu0 0.0
    %437 = vmatmul.mubr.f32.gmra.mxu0 %v365
    %v438 = vpop.f32.mrf.mxu0
    %v439 = vadd.f32 %v359, %v438
    %v440 = vpop.f32.mrf.mxu0
    %441 = vdwg.mxu0
    %v442 = vmax.f32 %v434, 0.0
    %v443 = vmax.f32 %v439, 0.0
    %v444 = vld [vmem:[%s6] sm:$0xff]
    %v445 = vld [vmem:[%s6 + $0x8] sm:$0xff]
    %447 = vset.pattern.permute.xlu0 0
    %448 = vperm.xlu0 %447, %v444
    %v449 = vpop.permute.xlu0 %448
    %452 = vset.pattern.permute.xlu0 0
    %453 = vperm.xlu0 %452, %v445
    %v454 = vpop.permute.xlu0 %453
    %v456 = vmul.f32 %v449, %v442
    %v457 = vmul.f32 %v454, %v443
    %v458 = vsel %vm238, %v456, 0.0
    %v459 = vsel %vm238, %v457, 0.0
    %v460 = vadd.f32 %v458, %v459
    %v461 = vrot.slane %v460, 4
    %v462 = vadd.f32 %v460, %v461
    %v463 = vrot.slane %v462, 2
    %v464 = vadd.f32 %v462, %v463
    %v465 = vrot.slane %v464, 1
    %v466 = vadd.f32 %v464, %v465
    %v467 = vadd.f32 %v248, %v466
    %vm468 = vcmask 253952
    %469 = vst.msk [vmem:[#allocation2] sm:$0x1] %vm468, %v467
    // Predicated region
    $region30: #{tpu_custom_call.1} parent=1 // pred_check
      _
    $region31: #{tpu_custom_call.1} parent=1 // pred_check_branch
      %471 = sbr.rel (0) target = $region33
    $region32: #{tpu_custom_call.1} parent=1 // pred_region
      %s473 = ssub.s32 16, 16
      %474 = vsyncadd [#allocation3], %s473
      %s476 = sshll.u32 [#allocation2], 4
      %s477 = int_to_ptr.vmem [resolvable:$true] %s476
      %479 = dma.vmem_to_hbm [thread:$0]  %s477, 16, %s7, [#allocation3]
    $region33: #{tpu_custom_call.1} parent=1 // pred_fallthru
      _
    // Predicated region
    $region34: #{tpu_custom_call.1} parent=1 // pred_check
      _
    $region35: #{tpu_custom_call.1} parent=1 // pred_check_branch
      %481 = sbr.rel (0) target = $region37
    $region36: #{tpu_custom_call.1} parent=1 // pred_region
      %482 = dma.done [#allocation3], 16
    $region37: #{tpu_custom_call.1} parent=1 // pred_fallthru
      _
    %483 = vsyncpa [#allocation3], 1

</llo_original>
